<compile_context>
chip_gen: v6e
topology: v6e:2x2x1
jax: 0.10.0
libtpu: 0.0.40
codegen_flags: <defaults>
</compile_context>

<pallas_src>
from functools import partial

import jax
import jax.numpy as jnp
from jax.experimental import pallas as pl
from jax.experimental.pallas import tpu as pltpu


def token_embed_kernel(x_ref, w_ref, b_ref, o_ref):
    """Computes one (batch, row-tile) output block.

    x_ref: (c_in, tp, ps)    f32  patch rows (cast to bf16 in-kernel for MXU)
    w_ref: (c_in, ps, N_pad) bf16 resident weight (constant block index)
    b_ref: (1, N_pad)        f32  bias
    o_ref: (tp, N_pad)             output rows (bias + ReLU applied)
    """
    c_in = x_ref.shape[0]
    # Channel reduction folded in-kernel: short unrolled sum of K=ps matmuls.
    acc = jnp.dot(x_ref[0].astype(jnp.bfloat16), w_ref[0],
                  preferred_element_type=jnp.float32)
    for c in range(1, c_in):
        acc += jnp.dot(x_ref[c].astype(jnp.bfloat16), w_ref[c],
                       preferred_element_type=jnp.float32)
    o_ref[...] = jnp.maximum(acc + b_ref[...], 0.0).astype(o_ref.dtype)


def _cdiv(a, b):
    return -(-a // b)


def _pick_row_tile(P, B, N_pad, c_in, ps,
                   target_rows=1024, buf_budget_bytes=10 * 1024 * 1024):
    """Row tile: multiple of 8, large output tiles, VMEM-budgeted, >=2 steps."""
    x_lanes = _cdiv(ps, 128) * 128                       # VMEM lane padding of x tile
    # Double-buffered output (f32) + double-buffered x (f32, lane-padded).
    row_bytes = 2 * (N_pad * 4 + c_in * x_lanes * 4)
    max_rows = max(8, (buf_budget_bytes // row_bytes) // 8 * 8)
    tp = min(target_rows, max_rows)
    # v7x megacore: if batch alone can't feed 2 TensorCores, force >=2 row tiles.
    if B < 2 and P > 8:
        tp = min(tp, max(8, _cdiv(_cdiv(P, 2), 8) * 8))
    tp = max(8, min(tp, _cdiv(P, 8) * 8))
    return (tp // 8) * 8


@partial(jax.jit, static_argnames=("t_patch_size", "row_tile", "out_dtype"))
def token_embedding_forward(x, weight, bias, t_patch_size, row_tile=None,
                            out_dtype=jnp.float32):
    """x: (B, c_in, L) f32; weight: (d_model, c_in, ps); bias: (d_model,).

    Returns (B, L // ps, d_model), matching
    relu(Conv1d(c_in, d_model, ps, stride=ps)(x)).permute(0, 2, 1).
    Any L % ps tail is dropped (Conv1d stride semantics).
    """
    B, c_in, L = x.shape
    d_model = weight.shape[0]
    ps = t_patch_size
    P = L // ps
    N_pad = _cdiv(d_model, 128) * 128                    # lane-dense output width

    # Contiguous reshape only (no HBM transpose, no wrapper dtype pass).
    x4 = x[:, :, :P * ps].reshape(B, c_in, P, ps)

    # (d_model, c_in, ps) -> (c_in, ps, N_pad); tiny array, negligible cost.
    w3 = jnp.transpose(weight, (1, 2, 0))
    b1 = bias.astype(jnp.float32)
    if N_pad != d_model:
        w3 = jnp.pad(w3, ((0, 0), (0, 0), (0, N_pad - d_model)))
        b1 = jnp.pad(b1, (0, N_pad - d_model))
    w3 = w3.astype(jnp.bfloat16)
    b2 = b1.reshape(1, N_pad)

    tp = row_tile if row_tile is not None else _pick_row_tile(P, B, N_pad, c_in, ps)
    n_tiles = _cdiv(P, tp)
    P_pad = n_tiles * tp
    if P_pad != P:
        # Pad rows (zeros) instead of falling back to one giant un-pipelined tile;
        # padded rows are sliced off below.
        x4 = jnp.pad(x4, ((0, 0), (0, 0), (0, P_pad - P), (0, 0)))

    grid = (B, n_tiles)
    out_bytes = jnp.dtype(out_dtype).itemsize

    # Explicit VMEM budget (v7x: 64 MiB physical / 32 MiB scoped default).
    x_lanes = _cdiv(ps, 128) * 128
    vmem_need = (2 * tp * N_pad * out_bytes
                 + 2 * c_in * tp * x_lanes * 4
                 + c_in * _cdiv(ps, 8) * 8 * N_pad * 2
                 + 8 * N_pad * 4)
    vmem_limit = int(min(max(2 * vmem_need, 16 * 1024 * 1024), 48 * 1024 * 1024))

    cost = pl.CostEstimate(
        flops=2 * B * P_pad * c_in * ps * N_pad,
        transcendentals=0,
        bytes_accessed=(x4.size * 4 + w3.size * 2 + b2.size * 4
                        + B * P_pad * N_pad * out_bytes),
    )

    out = pl.pallas_call(
        token_embed_kernel,
        out_shape=jax.ShapeDtypeStruct((B, P_pad, N_pad), out_dtype),
        grid_spec=pltpu.PrefetchScalarGridSpec(
            num_scalar_prefetch=0,
            grid=grid,
            in_specs=[
                # x4: (B, c_in, P_pad, ps) -> kernel sees (c_in, tp, ps)
                pl.BlockSpec((None, c_in, tp, ps), lambda b, pi: (b, 0, pi, 0)),
                # w3: (c_in, ps, N_pad) -> full resident block (constant index)
                pl.BlockSpec((c_in, ps, N_pad), lambda b, pi: (0, 0, 0)),
                # bias: (1, N_pad) -> resident
                pl.BlockSpec((1, N_pad), lambda b, pi: (0, 0)),
            ],
            # out: (B, P_pad, N_pad) -> kernel sees (tp, N_pad)
            out_specs=pl.BlockSpec((None, tp, N_pad), lambda b, pi: (b, pi, 0)),
        ),
        compiler_params=pltpu.CompilerParams(
            dimension_semantics=("parallel", "parallel"),
            vmem_limit_bytes=vmem_limit),
        cost_estimate=cost,
    )(x4, w3, b2)

    return out[:, :P, :d_model]


if __name__ == "__main__":
    # Small shapes consistent with the module's forward.
    B, c_in, L = 2, 4, 16
    d_model, t_patch_size = 32, 4

    key = jax.random.PRNGKey(0)
    kx, kw, kb = jax.random.split(key, 3)

    x = jax.random.normal(kx, (B, c_in, L), dtype=jnp.float32)

    # Deterministic parameter init (kaiming_normal-like conv weight).
    fan_in = c_in * t_patch_size
    weight = jax.random.normal(kw, (d_model, c_in, t_patch_size),
                               dtype=jnp.float32) * jnp.sqrt(2.0 / fan_in)
    # PyTorch Conv1d default bias init: U(-1/sqrt(fan_in), 1/sqrt(fan_in))
    bound = 1.0 / jnp.sqrt(fan_in)
    bias = jax.random.uniform(kb, (d_model,), dtype=jnp.float32,
                              minval=-bound, maxval=bound)

    out = token_embedding_forward(x, weight, bias, t_patch_size)
    out = jax.block_until_ready(out)

    # Pure-JAX reference of the same conv/relu/permute semantics, applying the
    # same bf16 MXU-input rounding the kernel uses (accumulation in f32).
    P = L // t_patch_size
    x_bf = x.astype(jnp.bfloat16).astype(jnp.float32)
    w_bf = weight.astype(jnp.bfloat16).astype(jnp.float32)
    patches = x_bf.reshape(B, c_in, P, t_patch_size).transpose(0, 2, 1, 3)
    ref = jnp.einsum("bpck,ock->bpo", patches, w_bf) + bias[None, None, :]
    ref = jnp.maximum(ref, 0.0)

    assert out.shape == (B, P, d_model), out.shape
    max_err = float(jnp.max(jnp.abs(out - ref)))
    assert jnp.allclose(out, ref, atol=1e-4, rtol=1e-4), max_err

    print("KERNEL_OK")
</pallas_src>

<mosaic_0001>
module attributes {stable_mosaic.version = 11 : i64} {
  func.func @token_embed_kernel(%arg0: i32, %arg1: i32, %arg2: memref<1x4x8x4xf32, #tpu.memory_space<vmem>>, %arg3: memref<4x4x128xbf16, #tpu.memory_space<vmem>>, %arg4: memref<1x128xf32, #tpu.memory_space<vmem>>, %arg5: memref<1x8x128xf32, #tpu.memory_space<vmem>>) attributes {dimension_semantics = [#tpu.dimension_semantics<parallel>, #tpu.dimension_semantics<parallel>], iteration_bounds = array<i64: 2, 1>, scalar_prefetch = 0 : i64, scratch_operands = 0 : i64, tpu.core_type = #tpu.core_type<tc>, window_params = [{transform_indices = @transform_0, window_bounds = array<i64: 1, 4, 8, 4>}, {pipeline_mode = #tpu.pipeline_mode<synchronous>, transform_indices = @transform_1, window_bounds = array<i64: 4, 4, 128>}, {pipeline_mode = #tpu.pipeline_mode<synchronous>, transform_indices = @transform_2, window_bounds = array<i64: 1, 128>}, {transform_indices = @transform_3, window_bounds = array<i64: 1, 8, 128>}]} {
    %c0 = arith.constant 0 : index
    %c0_0 = arith.constant 0 : index
    %c0_1 = arith.constant 0 : index
    %c0_2 = arith.constant 0 : index
    %0 = vector.load %arg2[%c0, %c0_0, %c0_1, %c0_2] : memref<1x4x8x4xf32, #tpu.memory_space<vmem>>, vector<1x1x8x4xf32>
    %1 = vector.shape_cast %0 : vector<1x1x8x4xf32> to vector<8x4xf32>
    %2 = arith.truncf %1 : vector<8x4xf32> to vector<8x4xbf16>
    %c0_3 = arith.constant 0 : index
    %c0_4 = arith.constant 0 : index
    %c0_5 = arith.constant 0 : index
    %3 = vector.load %arg3[%c0_3, %c0_4, %c0_5] : memref<4x4x128xbf16, #tpu.memory_space<vmem>>, vector<1x4x128xbf16>
    %4 = vector.shape_cast %3 : vector<1x4x128xbf16> to vector<4x128xbf16>
    %cst = arith.constant dense<0.000000e+00> : vector<8x128xf32>
    %5 = tpu.matmul %2, %4, %cst {dimension_numbers = #tpu.dot_dimension_numbers<[1], [0], [0], [1], [0, 0, 1, 1], [], []>} : vector<8x4xbf16>, vector<4x128xbf16>, vector<8x128xf32> -> vector<8x128xf32>
    %c0_6 = arith.constant 0 : index
    %c1 = arith.constant 1 : index
    %c0_7 = arith.constant 0 : index
    %c0_8 = arith.constant 0 : index
    %6 = vector.load %arg2[%c0_6, %c1, %c0_7, %c0_8] : memref<1x4x8x4xf32, #tpu.memory_space<vmem>>, vector<1x1x8x4xf32>
    %7 = vector.shape_cast %6 : vector<1x1x8x4xf32> to vector<8x4xf32>
    %8 = arith.truncf %7 : vector<8x4xf32> to vector<8x4xbf16>
    %c1_9 = arith.constant 1 : index
    %c0_10 = arith.constant 0 : index
    %c0_11 = arith.constant 0 : index
    %9 = vector.load %arg3[%c1_9, %c0_10, %c0_11] : memref<4x4x128xbf16, #tpu.memory_space<vmem>>, vector<1x4x128xbf16>
    %10 = vector.shape_cast %9 : vector<1x4x128xbf16> to vector<4x128xbf16>
    %cst_12 = arith.constant dense<0.000000e+00> : vector<8x128xf32>
    %11 = tpu.matmul %8, %10, %cst_12 {dimension_numbers = #tpu.dot_dimension_numbers<[1], [0], [0], [1], [0, 0, 1, 1], [], []>} : vector<8x4xbf16>, vector<4x128xbf16>, vector<8x128xf32> -> vector<8x128xf32>
    %12 = arith.addf %5, %11 : vector<8x128xf32>
    %c0_13 = arith.constant 0 : index
    %c2 = arith.constant 2 : index
    %c0_14 = arith.constant 0 : index
    %c0_15 = arith.constant 0 : index
    %13 = vector.load %arg2[%c0_13, %c2, %c0_14, %c0_15] : memref<1x4x8x4xf32, #tpu.memory_space<vmem>>, vector<1x1x8x4xf32>
    %14 = vector.shape_cast %13 : vector<1x1x8x4xf32> to vector<8x4xf32>
    %15 = arith.truncf %14 : vector<8x4xf32> to vector<8x4xbf16>
    %c2_16 = arith.constant 2 : index
    %c0_17 = arith.constant 0 : index
    %c0_18 = arith.constant 0 : index
    %16 = vector.load %arg3[%c2_16, %c0_17, %c0_18] : memref<4x4x128xbf16, #tpu.memory_space<vmem>>, vector<1x4x128xbf16>
    %17 = vector.shape_cast %16 : vector<1x4x128xbf16> to vector<4x128xbf16>
    %cst_19 = arith.constant dense<0.000000e+00> : vector<8x128xf32>
    %18 = tpu.matmul %15, %17, %cst_19 {dimension_numbers = #tpu.dot_dimension_numbers<[1], [0], [0], [1], [0, 0, 1, 1], [], []>} : vector<8x4xbf16>, vector<4x128xbf16>, vector<8x128xf32> -> vector<8x128xf32>
    %19 = arith.addf %12, %18 : vector<8x128xf32>
    %c0_20 = arith.constant 0 : index
    %c3 = arith.constant 3 : index
    %c0_21 = arith.constant 0 : index
    %c0_22 = arith.constant 0 : index
    %20 = vector.load %arg2[%c0_20, %c3, %c0_21, %c0_22] : memref<1x4x8x4xf32, #tpu.memory_space<vmem>>, vector<1x1x8x4xf32>
    %21 = vector.shape_cast %20 : vector<1x1x8x4xf32> to vector<8x4xf32>
    %22 = arith.truncf %21 : vector<8x4xf32> to vector<8x4xbf16>
    %c3_23 = arith.constant 3 : index
    %c0_24 = arith.constant 0 : index
    %c0_25 = arith.constant 0 : index
    %23 = vector.load %arg3[%c3_23, %c0_24, %c0_25] : memref<4x4x128xbf16, #tpu.memory_space<vmem>>, vector<1x4x128xbf16>
    %24 = vector.shape_cast %23 : vector<1x4x128xbf16> to vector<4x128xbf16>
    %cst_26 = arith.constant dense<0.000000e+00> : vector<8x128xf32>
    %25 = tpu.matmul %22, %24, %cst_26 {dimension_numbers = #tpu.dot_dimension_numbers<[1], [0], [0], [1], [0, 0, 1, 1], [], []>} : vector<8x4xbf16>, vector<4x128xbf16>, vector<8x128xf32> -> vector<8x128xf32>
    %26 = arith.addf %19, %25 : vector<8x128xf32>
    %c0_27 = arith.constant 0 : index
    %c0_28 = arith.constant 0 : index
    %27 = vector.load %arg4[%c0_27, %c0_28] : memref<1x128xf32, #tpu.memory_space<vmem>>, vector<1x128xf32>
    %28 = vector.broadcast %27 : vector<1x128xf32> to vector<8x128xf32>
    %29 = arith.addf %26, %28 : vector<8x128xf32>
    %cst_29 = arith.constant 0.000000e+00 : f32
    %30 = vector.broadcast %cst_29 : f32 to vector<8x128xf32>
    %31 = arith.maximumf %29, %30 : vector<8x128xf32>
    %c0_30 = arith.constant 0 : index
    %c0_31 = arith.constant 0 : index
    %c0_32 = arith.constant 0 : index
    %32 = vector.load %arg5[%c0_30, %c0_31, %c0_32] : memref<1x8x128xf32, #tpu.memory_space<vmem>>, vector<1x8x128xf32>
    %33 = vector.shape_cast %32 : vector<1x8x128xf32> to vector<8x128xf32>
    %34 = vector.shape_cast %31 : vector<8x128xf32> to vector<1x8x128xf32>
    tpu.vector_store %arg5[%c0_30, %c0_31, %c0_32], %34 {strides = array<i32>} : memref<1x8x128xf32, #tpu.memory_space<vmem>>, vector<1x8x128xf32>,
    return
  }
  func.func @transform_0(%arg0: i32, %arg1: i32) -> (i32, i32, i32, i32) {
    %c0_i32 = arith.constant 0 : i32
    %c0_i32_0 = arith.constant 0 : i32
    %c0_i32_1 = arith.constant 0 : i32
    return %arg0, %c0_i32, %arg1, %c0_i32_0 : i32, i32, i32, i32
  }
  func.func @transform_1(%arg0: i32, %arg1: i32) -> (i32, i32, i32) {
    %c0_i32 = arith.constant 0 : i32
    %c0_i32_0 = arith.constant 0 : i32
    %c0_i32_1 = arith.constant 0 : i32
    %c0_i32_2 = arith.constant 0 : i32
    return %c0_i32, %c0_i32_0, %c0_i32_1 : i32, i32, i32
  }
  func.func @transform_2(%arg0: i32, %arg1: i32) -> (i32, i32) {
    %c0_i32 = arith.constant 0 : i32
    %c0_i32_0 = arith.constant 0 : i32
    %c0_i32_1 = arith.constant 0 : i32
    return %c0_i32, %c0_i32_0 : i32, i32
  }
  func.func @transform_3(%arg0: i32, %arg1: i32) -> (i32, i32, i32) {
    %c0_i32 = arith.constant 0 : i32
    %c0_i32_0 = arith.constant 0 : i32
    return %arg0, %arg1, %c0_i32 : i32, i32, i32
  }
}

</mosaic_0001>

<llo_original>
// kernel: token_embedding_forward.1
$region0: #{token_embedding_forward.1}
  #allocation0 [shape = 'u32[]', space=smem, size = 0x4, offset = 0x4, fixed_abs, tag = 'smem constant byte address 0x4 - core index']
  #allocation1 [shape = 'u32[144,128]{1,0:T(1,128)}', space=vmem, size = 0x12000, scoped, tag = 'internal scratch']
  %s0 = inlined_call_operand.vmem [shape: f32[2,4,8,4], index: 0, kind: input, shape index: {}]
  %s1 = inlined_call_operand.vmem [shape: bf16[4,4,128], index: 1, kind: input, shape index: {}]
  %s2 = inlined_call_operand.vmem [shape: f32[1,128], index: 2, kind: input, shape index: {}]
  %s3 = inlined_call_operand.vmem [shape: f32[2,8,128], index: 3, kind: output, shape index: {}]
  %s4 = sld [smem:[#allocation0]]
  $region45: #{token_embedding_forward.1} parent=0
    _
  %s6 = ssub.s32 1, %s4
  %s7 = scalar_select 0, %s6, %s4
  loop: start=0, step=1, limit=4
  $region2: #{token_embedding_forward.1} parent=0 // loop_pre_header
    _
  $region3: #{token_embedding_forward.1} parent=0 // loop_header
    %s9 = sphi 0, %s13
    %p10 = scmp.ge.s32.totalorder %s9, 4
    %s16 = sphi 0, %s28
    %s17 = sphi 0, %s24
    %s18 = sphi 0, %s16
    %s19 = sphi 0, %s17
    %s20 = sphi 0, %s18
    %s21 = sphi 0, %s19
    %s33 = sphi 0, %s35
    %s36 = sphi 0, %s33
    %s37 = sphi 0, %s36
    %s53 = sphi 0, %s37
    %s57 = sphi 0, %s57
    %s59 = sphi 0, %s57
    %s60 = sphi 0, %s59
    %s74 = sphi 0, %s60
    %s78 = sphi 0, %s78
    %s80 = sphi 0, %s78
    %s81 = sphi 0, %s80
    %s95 = sphi 0, %s81
    %s103 = sphi 0, %s105
    %s106 = sphi 0, %s103
    %s107 = sphi 0, %s106
    %s123 = sphi 0, %s107
  $region4: #{token_embedding_forward.1} parent=0 // loop_header_branch
    %12 = sbr.rel (%p10) target = $region8
  $region5: #{token_embedding_forward.1} parent=0 // loop_body
    %s14 = ssub.s32 %s9, 1
    %s15 = ssub.s32 %s9, 2
    %s22 = sadd.s32 1, %s17
    %p23 = scmp.ge.s32.totalorder %s22, 1
    %s24 = scalar_select %p23, 0, %s22
    %s25 = sadd.s32 1, %s16
    %s26 = scalar_select %p23, %s25, %s16
    %p27 = scmp.ge.s32.totalorder %s26, 2
    %s28 = scalar_select %p27, 0, %s26
    %s29 = ssub.s32 %s16, %s28
    %s30 = ssub.s32 %s17, %s24
    %s31 = sor.u32 %s29, %s30
    %p32 = scmp.eq.s32.totalorder %s31, 0
    %s34 = sadd.s32 %s33, 1
    %s35 = scalar_select %p32, %s33, %s34
    %p38 = pneg %p32
    %p39 = scmp.eq.s32.totalorder %s9, 1
    %p40 = por %p38, %p39
    %p41 = scmp.ne.s32.totalorder %s33, %s36
    %p42 = scmp.eq.s32.totalorder %s9, 0
    %p43 = por %p41, %p42
    %p44 = scmp.ne.s32.totalorder %s33, %s36
    %p45 = scmp.eq.s32.totalorder %s14, 1
    %p46 = por %p44, %p45
    %p47 = scmp.ne.s32.totalorder %s36, %s37
    %p48 = scmp.eq.s32.totalorder %s14, 0
    %p49 = por %p47, %p48
    %p50 = scmp.ne.s32.totalorder %s36, %s37
    %p51 = scmp.eq.s32.totalorder %s15, 1
    %p52 = por %p50, %p51
    %p54 = scmp.ne.s32.totalorder %s37, %s53
    %p55 = scmp.eq.s32.totalorder %s15, 0
    %p56 = por %p54, %p55
    %s58 = sadd.s32 %s57, 1
    %p61 = scmp.eq.s32.totalorder %s9, 1
    %p62 = scmp.ne.s32.totalorder %s57, %s59
    %p63 = scmp.eq.s32.totalorder %s9, 0
    %p64 = por %p62, %p63
    %p65 = scmp.ne.s32.totalorder %s57, %s59
    %p66 = scmp.eq.s32.totalorder %s14, 1
    %p67 = por %p65, %p66
    %p68 = scmp.ne.s32.totalorder %s59, %s60
    %p69 = scmp.eq.s32.totalorder %s14, 0
    %p70 = por %p68, %p69
    %p71 = scmp.ne.s32.totalorder %s59, %s60
    %p72 = scmp.eq.s32.totalorder %s15, 1
    %p73 = por %p71, %p72
    %p75 = scmp.ne.s32.totalorder %s60, %s74
    %p76 = scmp.eq.s32.totalorder %s15, 0
    %p77 = por %p75, %p76
    %s79 = sadd.s32 %s78, 1
    %p82 = scmp.eq.s32.totalorder %s9, 1
    %p83 = scmp.ne.s32.totalorder %s78, %s80
    %p84 = scmp.eq.s32.totalorder %s9, 0
    %p85 = por %p83, %p84
    %p86 = scmp.ne.s32.totalorder %s78, %s80
    %p87 = scmp.eq.s32.totalorder %s14, 1
    %p88 = por %p86, %p87
    %p89 = scmp.ne.s32.totalorder %s80, %s81
    %p90 = scmp.eq.s32.totalorder %s14, 0
    %p91 = por %p89, %p90
    %p92 = scmp.ne.s32.totalorder %s80, %s81
    %p93 = scmp.eq.s32.totalorder %s15, 1
    %p94 = por %p92, %p93
    %p96 = scmp.ne.s32.totalorder %s81, %s95
    %p97 = scmp.eq.s32.totalorder %s15, 0
    %p98 = por %p96, %p97
    %s99 = ssub.s32 %s16, %s28
    %s100 = ssub.s32 %s17, %s24
    %s101 = sor.u32 %s99, %s100
    %p102 = scmp.eq.s32.totalorder %s101, 0
    %s104 = sadd.s32 %s103, 1
    %s105 = scalar_select %p102, %s103, %s104
    %p108 = pneg %p102
    %p109 = scmp.eq.s32.totalorder %s9, 1
    %p110 = por %p108, %p109
    %p111 = scmp.ne.s32.totalorder %s103, %s106
    %p112 = scmp.eq.s32.totalorder %s9, 0
    %p113 = por %p111, %p112
    %p114 = scmp.ne.s32.totalorder %s103, %s106
    %p115 = scmp.eq.s32.totalorder %s14, 1
    %p116 = por %p114, %p115
    %p117 = scmp.ne.s32.totalorder %s106, %s107
    %p118 = scmp.eq.s32.totalorder %s14, 0
    %p119 = por %p117, %p118
    %p120 = scmp.ne.s32.totalorder %s106, %s107
    %p121 = scmp.eq.s32.totalorder %s15, 1
    %p122 = por %p120, %p121
    %p124 = scmp.ne.s32.totalorder %s107, %s123
    %p125 = scmp.eq.s32.totalorder %s15, 0
    %p126 = por %p124, %p125
    %p127 = scmp.le.s32.totalorder 1, %s9
    %p128 = scmp.lt.s32.totalorder %s9, 3
    %p129 = pnand %p127, %p128
    %p130 = pneg %p129
    // Predicated region
    $region9: #{token_embedding_forward.1} parent=5 // pred_check
      _
    $region10: #{token_embedding_forward.1} parent=5 // pred_check_branch
      %132 = sbr.rel (%p129) target = $region12
    $region11: #{token_embedding_forward.1} parent=5 // pred_region
      %s133 = ssub.s32 %s9, 1
      // Predicated region
      $region13: #{token_embedding_forward.1} parent=11 // pred_check
        %p134 = pneg %p70
      $region14: #{token_embedding_forward.1} parent=11 // pred_check_branch
        %136 = sbr.rel (%p134) target = $region16
      $region15: #{token_embedding_forward.1} parent=11 // pred_region
        _
      $region16: #{token_embedding_forward.1} parent=11 // pred_fallthru
        _
      // Predicated region
      $region17: #{token_embedding_forward.1} parent=11 // pred_check
        %p137 = pneg %p91
      $region18: #{token_embedding_forward.1} parent=11 // pred_check_branch
        %139 = sbr.rel (%p137) target = $region20
      $region19: #{token_embedding_forward.1} parent=11 // pred_region
        _
      $region20: #{token_embedding_forward.1} parent=11 // pred_fallthru
        _
    $region12: #{token_embedding_forward.1} parent=5 // pred_fallthru
      _
    %p140 = scmp.lt.s32.totalorder %s9, 2
    // Predicated region
    $region21: #{token_embedding_forward.1} parent=5 // pred_check
      %p141 = pneg %p140
    $region22: #{token_embedding_forward.1} parent=5 // pred_check_branch
      %143 = sbr.rel (%p141) target = $region24
    $region23: #{token_embedding_forward.1} parent=5 // pred_region
      // Predicated region
      $region25: #{token_embedding_forward.1} parent=23 // pred_check
        %p144 = pneg %p43
      $region26: #{token_embedding_forward.1} parent=23 // pred_check_branch
        %146 = sbr.rel (%p144) target = $region28
      $region27: #{token_embedding_forward.1} parent=23 // pred_region
        %p147 = scmp.lt.s32.totalorder %s16, 1
        %s148 = scalar_select %p147, %s16, 1
        %p149 = scmp.lt.s32.totalorder %s17, 0
        %s150 = scalar_select %p149, %s17, 0
        %s151 = smul.addr %s148, 4
        %s152 = sadd.s32 %s150, %s151
        %s153 = smul.addr %s152, 8
        %s154 = scalar_lea.vmem %s0, %s153
      $region28: #{token_embedding_forward.1} parent=23 // pred_fallthru
        _
    $region24: #{token_embedding_forward.1} parent=5 // pred_fallthru
      _
    %p155 = scmp.le.s32.totalorder 1, %s9
    %p156 = scmp.lt.s32.totalorder %s9, 3
    %p157 = pnand %p155, %p156
    %p158 = pneg %p157
    // Predicated region
    $region29: #{token_embedding_forward.1} parent=5 // pred_check
      _
    $region30: #{token_embedding_forward.1} parent=5 // pred_check_branch
      %160 = sbr.rel (%p157) target = $region32
    $region31: #{token_embedding_forward.1} parent=5 // pred_region
      %s161 = ssub.s32 %s9, 1
      %p162 = scmp.lt.s32.totalorder %s18, 1
      %s163 = scalar_select %p162, %s18, 1
      %p164 = scmp.lt.s32.totalorder %s19, 0
      %s165 = scalar_select %p164, %s19, 0
      %s166 = smul.addr %s163, 4
      %s167 = sadd.s32 %s165, %s166
      %s168 = smul.addr %s167, 8
      %s169 = scalar_lea.vmem %s0, %s168
      %p170 = pneg %p49
      %p171 = pneg %p46
      %p172 = pneg %p70
      %p173 = pneg %p67
      %p174 = pneg %p91
      %p175 = pneg %p88
      %p176 = pneg %p119
      %p177 = pneg %p116
      %p178 = scmp.lt.s32.totalorder %s18, 1
      %s179 = scalar_select %p178, %s18, 1
      %p180 = scmp.lt.s32.totalorder %s19, 0
      %s181 = scalar_select %p180, %s19, 0
      %s182 = sadd.s32 %s181, %s179
      %s183 = smul.addr %s182, 8
      %s184 = scalar_lea.vmem %s3, %s183
      %p185 = scmp.lt.s32.totalorder %s18, 1
      %s186 = scalar_select %p185, %s18, 1
      %p187 = scmp.lt.s32.totalorder %s19, 0
      %s188 = scalar_select %p187, %s19, 0
      %s189 = smul.addr %s186, 4
      %s190 = sadd.s32 %s188, %s189
      %s191 = smul.addr %s190, 8
      %s192 = scalar_lea.vmem %s0, %s191
      %p193 = scmp.lt.s32.totalorder %s18, 1
      %s194 = scalar_select %p193, %s18, 1
      %p195 = scmp.lt.s32.totalorder %s19, 0
      %s196 = scalar_select %p195, %s19, 0
      %s197 = sadd.s32 %s196, %s194
      %s198 = smul.addr %s197, 8
      %s199 = scalar_lea.vmem %s3, %s198
      %v201 = vld [vmem:[%s192] sm:$0xff]
      %v202 = vpack.c.bf16 %v201, %v201
      %v203 = vld [vmem:[%s1] sm:$0x3]
      %s204 = scalar_lea.vmem %s192, 8
      %v205 = vld [vmem:[%s204] sm:$0xff]
      %v206 = vpack.c.bf16 %v205, %v205
      %s207 = scalar_lea.vmem %s1, 2
      %v208 = vld [vmem:[%s207] sm:$0x3]
      %vm209 = vcmask 31744
      %v211 = vsel %vm209, %v206, 0
      %vm213 = vcmask 1041408
      %v215 = vsel %vm213, %v208, 0
      %217 = vmatprep.subr.bf16.mxu0 0
      %218 = vmatpush1.bf16.msra.mxu0 0
      %219 = vmatprep.subr.bf16.mxu0 0
      %220 = vmatpush1.bf16.msra.mxu0 0
      %221 = vmatprep.subr.bf16.mxu0 0
      %222 = vmatpush1.bf16.msra.mxu0 0
      %223 = vmatprep.subr.bf16.mxu0 0
      %224 = vmatpush1.bf16.msra.mxu0 0
      %225 = vmatprep.subr.bf16.mxu0 0
      %226 = vmatpush1.bf16.msra.mxu0 0
      %227 = vmatprep.subr.bf16.mxu0 0
      %228 = vmatpush1.bf16.msra.mxu0 0
      %229 = vmatprep.subr.bf16.mxu0 0
      %230 = vmatpush1.bf16.msra.mxu0 0
      %231 = vmatprep.subr.bf16.mxu0 0
      %232 = vmatpush1.bf16.msra.mxu0 %v215
      %233 = vmatprep.subr.bf16.mxu0 0
      %234 = vmatpush2.bf16.msra.mxu0 0
      %235 = vmatprep.subr.bf16.mxu0 0
      %236 = vmatpush2.bf16.msra.mxu0 0
      %237 = vmatprep.subr.bf16.mxu0 0
      %238 = vmatpush2.bf16.msra.mxu0 0
      %239 = vmatprep.subr.bf16.mxu0 0
      %240 = vmatpush2.bf16.msra.mxu0 0
      %241 = vmatprep.subr.bf16.mxu0 0
      %242 = vmatpush2.bf16.msra.mxu0 0
      %243 = vmatprep.subr.bf16.mxu0 0
      %244 = vmatpush2.bf16.msra.mxu0 0
      %245 = vmatprep.subr.bf16.mxu0 0
      %246 = vmatpush2.bf16.msra.mxu0 0
      %247 = vmatprep.subr.bf16.mxu0 0
      %248 = vmatpush2.bf16.msra.mxu0 0
      %249 = vmatprep.mubr.bf16.mxu0 0
      %250 = vmatmul.mubr.bf16.gmra.mxu0 %v211
      %v251 = vpop.f32.mrf.mxu0
      %v252 = vadd.f32 0.0, %v251
      %v253 = vpop.f32.mrf.mxu0
      %v254 = vpop.f32.mrf.mxu0
      %v255 = vpop.f32.mrf.mxu0
      %256 = vdwg.mxu0
      %v258 = vsel %vm209, %v202, 0
      %v261 = vsel %vm213, %v203, 0
      %263 = vmatprep.subr.bf16.mxu0 0
      %264 = vmatpush1.bf16.msra.mxu0 0
      %265 = vmatprep.subr.bf16.mxu0 0
      %266 = vmatpush1.bf16.msra.mxu0 0
      %267 = vmatprep.subr.bf16.mxu0 0
      %268 = vmatpush1.bf16.msra.mxu0 0
      %269 = vmatprep.subr.bf16.mxu0 0
      %270 = vmatpush1.bf16.msra.mxu0 0
      %271 = vmatprep.subr.bf16.mxu0 0
      %272 = vmatpush1.bf16.msra.mxu0 0
      %273 = vmatprep.subr.bf16.mxu0 0
      %274 = vmatpush1.bf16.msra.mxu0 0
      %275 = vmatprep.subr.bf16.mxu0 0
      %276 = vmatpush1.bf16.msra.mxu0 0
      %277 = vmatprep.subr.bf16.mxu0 0
      %278 = vmatpush1.bf16.msra.mxu0 %v261
      %279 = vmatprep.subr.bf16.mxu0 0
      %280 = vmatpush2.bf16.msra.mxu0 0
      %281 = vmatprep.subr.bf16.mxu0 0
      %282 = vmatpush2.bf16.msra.mxu0 0
      %283 = vmatprep.subr.bf16.mxu0 0
      %284 = vmatpush2.bf16.msra.mxu0 0
      %285 = vmatprep.subr.bf16.mxu0 0
      %286 = vmatpush2.bf16.msra.mxu0 0
      %287 = vmatprep.subr.bf16.mxu0 0
      %288 = vmatpush2.bf16.msra.mxu0 0
      %289 = vmatprep.subr.bf16.mxu0 0
      %290 = vmatpush2.bf16.msra.mxu0 0
      %291 = vmatprep.subr.bf16.mxu0 0
      %292 = vmatpush2.bf16.msra.mxu0 0
      %293 = vmatprep.subr.bf16.mxu0 0
      %294 = vmatpush2.bf16.msra.mxu0 0
      %295 = vmatprep.mubr.bf16.mxu0 0
      %296 = vmatmul.mubr.bf16.gmra.mxu0 %v258
      %v297 = vpop.f32.mrf.mxu0
      %v298 = vadd.f32 %v252, %v297
      %v299 = vpop.f32.mrf.mxu0
      %v300 = vpop.f32.mrf.mxu0
      %v301 = vpop.f32.mrf.mxu0
      %302 = vdwg.mxu0
      %s303 = scalar_lea.vmem %s192, 16
      %v304 = vld [vmem:[%s303] sm:$0xff]
      %v305 = vpack.c.bf16 %v304, %v304
      %s306 = scalar_lea.vmem %s1, 4
      %v307 = vld [vmem:[%s306] sm:$0x3]
      %v309 = vsel %vm209, %v305, 0
      %v312 = vsel %vm213, %v307, 0
      %314 = vmatprep.subr.bf16.mxu0 0
      %315 = vmatpush1.bf16.msra.mxu0 0
      %316 = vmatprep.subr.bf16.mxu0 0
      %317 = vmatpush1.bf16.msra.mxu0 0
      %318 = vmatprep.subr.bf16.mxu0 0
      %319 = vmatpush1.bf16.msra.mxu0 0
      %320 = vmatprep.subr.bf16.mxu0 0
      %321 = vmatpush1.bf16.msra.mxu0 0
      %322 = vmatprep.subr.bf16.mxu0 0
      %323 = vmatpush1.bf16.msra.mxu0 0
      %324 = vmatprep.subr.bf16.mxu0 0
      %325 = vmatpush1.bf16.msra.mxu0 0
      %326 = vmatprep.subr.bf16.mxu0 0
      %327 = vmatpush1.bf16.msra.mxu0 0
      %328 = vmatprep.subr.bf16.mxu0 0
      %329 = vmatpush1.bf16.msra.mxu0 %v312
      %330 = vmatprep.subr.bf16.mxu0 0
      %331 = vmatpush2.bf16.msra.mxu0 0
      %332 = vmatprep.subr.bf16.mxu0 0
      %333 = vmatpush2.bf16.msra.mxu0 0
      %334 = vmatprep.subr.bf16.mxu0 0
      %335 = vmatpush2.bf16.msra.mxu0 0
      %336 = vmatprep.subr.bf16.mxu0 0
      %337 = vmatpush2.bf16.msra.mxu0 0
      %338 = vmatprep.subr.bf16.mxu0 0
      %339 = vmatpush2.bf16.msra.mxu0 0
      %340 = vmatprep.subr.bf16.mxu0 0
      %341 = vmatpush2.bf16.msra.mxu0 0
      %342 = vmatprep.subr.bf16.mxu0 0
      %343 = vmatpush2.bf16.msra.mxu0 0
      %344 = vmatprep.subr.bf16.mxu0 0
      %345 = vmatpush2.bf16.msra.mxu0 0
      %346 = vmatprep.mubr.bf16.mxu0 0
      %347 = vmatmul.mubr.bf16.gmra.mxu0 %v309
      %v348 = vpop.f32.mrf.mxu0
      %v349 = vadd.f32 0.0, %v348
      %v350 = vpop.f32.mrf.mxu0
      %v351 = vpop.f32.mrf.mxu0
      %v352 = vpop.f32.mrf.mxu0
      %353 = vdwg.mxu0
      %v354 = vadd.f32 %v298, %v349
      %s355 = scalar_lea.vmem %s192, 24
      %v356 = vld [vmem:[%s355] sm:$0xff]
      %v357 = vpack.c.bf16 %v356, %v356
      %s358 = scalar_lea.vmem %s1, 6
      %v359 = vld [vmem:[%s358] sm:$0x3]
      %v361 = vsel %vm209, %v357, 0
      %v364 = vsel %vm213, %v359, 0
      %366 = vmatprep.subr.bf16.mxu0 0
      %367 = vmatpush1.bf16.msra.mxu0 0
      %368 = vmatprep.subr.bf16.mxu0 0
      %369 = vmatpush1.bf16.msra.mxu0 0
      %370 = vmatprep.subr.bf16.mxu0 0
      %371 = vmatpush1.bf16.msra.mxu0 0
      %372 = vmatprep.subr.bf16.mxu0 0
      %373 = vmatpush1.bf16.msra.mxu0 0
      %374 = vmatprep.subr.bf16.mxu0 0
      %375 = vmatpush1.bf16.msra.mxu0 0
      %376 = vmatprep.subr.bf16.mxu0 0
      %377 = vmatpush1.bf16.msra.mxu0 0
      %378 = vmatprep.subr.bf16.mxu0 0
      %379 = vmatpush1.bf16.msra.mxu0 0
      %380 = vmatprep.subr.bf16.mxu0 0
      %381 = vmatpush1.bf16.msra.mxu0 %v364
      %382 = vmatprep.subr.bf16.mxu0 0
      %383 = vmatpush2.bf16.msra.mxu0 0
      %384 = vmatprep.subr.bf16.mxu0 0
      %385 = vmatpush2.bf16.msra.mxu0 0
      %386 = vmatprep.subr.bf16.mxu0 0
      %387 = vmatpush2.bf16.msra.mxu0 0
      %388 = vmatprep.subr.bf16.mxu0 0
      %389 = vmatpush2.bf16.msra.mxu0 0
      %390 = vmatprep.subr.bf16.mxu0 0
      %391 = vmatpush2.bf16.msra.mxu0 0
      %392 = vmatprep.subr.bf16.mxu0 0
      %393 = vmatpush2.bf16.msra.mxu0 0
      %394 = vmatprep.subr.bf16.mxu0 0
      %395 = vmatpush2.bf16.msra.mxu0 0
      %396 = vmatprep.subr.bf16.mxu0 0
      %397 = vmatpush2.bf16.msra.mxu0 0
      %398 = vmatprep.mubr.bf16.mxu0 0
      %399 = vmatmul.mubr.bf16.gmra.mxu0 %v361
      %v400 = vpop.f32.mrf.mxu0
      %v401 = vadd.f32 0.0, %v400
      %v402 = vpop.f32.mrf.mxu0
      %v403 = vpop.f32.mrf.mxu0
      %v404 = vpop.f32.mrf.mxu0
      %405 = vdwg.mxu0
      %v406 = vadd.f32 %v354, %v401
      %v407 = vld [vmem:[%s2] sm:$0x1]
      %v409 = vlaneseq
      %v410 = vshrl.u32 %v409, 7
      %v411 = vsub.s32 0, %v410
      %v412 = vrot.slane %v407, %v411
      %v414 = vadd.f32 %v406, %v412
      %v415 = vmax.f32 %v414, 0.0
      %416 = vst [vmem:[%s199] sm:$0xff] %v415
      %p417 = scmp.lt.s32.totalorder %s18, 1
      %s418 = scalar_select %p417, %s18, 1
      %p419 = scmp.lt.s32.totalorder %s19, 0
      %s420 = scalar_select %p419, %s19, 0
      %s421 = sadd.s32 %s420, %s418
      %s422 = smul.addr %s421, 8
      %s423 = scalar_lea.vmem %s3, %s422
      // Predicated region
      $region33: #{token_embedding_forward.1} parent=31 // pred_check
        %p424 = pneg %p116
      $region34: #{token_embedding_forward.1} parent=31 // pred_check_branch
        %426 = sbr.rel (%p424) target = $region36
      $region35: #{token_embedding_forward.1} parent=31 // pred_region
        _
      $region36: #{token_embedding_forward.1} parent=31 // pred_fallthru
        _
    $region32: #{token_embedding_forward.1} parent=5 // pred_fallthru
      _
    %p427 = scmp.le.s32.totalorder 2, %s9
    // Predicated region
    $region37: #{token_embedding_forward.1} parent=5 // pred_check
      %p428 = pneg %p427
    $region38: #{token_embedding_forward.1} parent=5 // pred_check_branch
      %430 = sbr.rel (%p428) target = $region40
    $region39: #{token_embedding_forward.1} parent=5 // pred_region
      %s431 = ssub.s32 %s9, 2
      // Predicated region
      $region41: #{token_embedding_forward.1} parent=39 // pred_check
        %p432 = pneg %p122
      $region42: #{token_embedding_forward.1} parent=39 // pred_check_branch
        %434 = sbr.rel (%p432) target = $region44
      $region43: #{token_embedding_forward.1} parent=39 // pred_region
        %p435 = scmp.lt.s32.totalorder %s20, 1
        %s436 = scalar_select %p435, %s20, 1
        %p437 = scmp.lt.s32.totalorder %s21, 0
        %s438 = scalar_select %p437, %s21, 0
        %s439 = sadd.s32 %s438, %s436
        %s440 = smul.addr %s439, 8
        %s441 = scalar_lea.vmem %s3, %s440
      $region44: #{token_embedding_forward.1} parent=39 // pred_fallthru
        _
    $region40: #{token_embedding_forward.1} parent=5 // pred_fallthru
      _
  $region6: #{token_embedding_forward.1} parent=0 // loop_footer
    %s13 = sadd.s32 1, %s9
  $region7: #{token_embedding_forward.1} parent=0 // loop_footer_branch
    %8 = sbr.rel target = $region3
  $region8: #{token_embedding_forward.1} parent=0 // loop_exit
    _

</llo_original>
